<compile_context>
chip_gen: v5e
topology: v5e:2x2
jax: 0.10.0
libtpu: 0.0.40
codegen_flags: <defaults>
</compile_context>

<pallas_src>
import jax
import jax.numpy as jnp
from jax.experimental import pallas as pl
from jax.experimental.pallas import tpu as pltpu


# ---------------------------------------------------------------------------
# Weight packing (hoisted out of the forward path; call once per weight update).
# ---------------------------------------------------------------------------
def pack_glow_conv_weights(weight_oihw: jax.Array, width: int) -> jax.Array:
    """Fold the KW taps, Cin, and the width-direction 'same' zero padding into a
    block-banded matrix  B[dy, wi*Cin+ci, w*Cout+co] = weight[co, ci, dy, wi-w+pw]
    (zero outside the band), so the conv becomes KH lane-dense matmuls with
    K = W*Cin and lane-dense N = W*Cout."""
    Cout, Cin, KH, KW = weight_oihw.shape
    # compute_same_pad's symmetric formula is only correct for odd kernels
    # (PyTorch 'same' pads asymmetrically for even kernels).
    assert KH % 2 == 1 and KW % 2 == 1, "odd kernel sizes only"
    pw = ((KW - 1) + 1) // 2
    W = width
    w_hwio = jnp.transpose(weight_oihw, (2, 3, 1, 0)).astype(jnp.float32)  # (KH,KW,Cin,Cout)
    dxs = jnp.arange(KW)[:, None, None]
    wis = jnp.arange(W)[None, :, None]
    wos = jnp.arange(W)[None, None, :]
    shift = (wis == wos + dxs - pw).astype(jnp.float32)                    # (KW, W_in, W_out)
    banded = jnp.einsum('xiw,yxco->yicwo', shift, w_hwio)                  # (KH,W,Cin,W,Cout)
    return banded.reshape(KH, W * Cin, W * Cout).astype(jnp.bfloat16)


# ---------------------------------------------------------------------------
# Fused forward: conv (banded matmuls) + batch ActNorm stats + normalize.
# ---------------------------------------------------------------------------
def conv2d_glow(x_nchw: jax.Array, banded: jax.Array) -> jax.Array:
    N, Cin, H, W = x_nchw.shape
    KH, WCin, WC = banded.shape
    assert WCin == W * Cin, "banded weights were packed for a different width/Cin"
    Cout = WC // W
    ph = ((KH - 1) + 1) // 2
    Hp = H + 2 * ph
    assert W & (W - 1) == 0, "roll-tree channel reduction assumes power-of-two W"
    # TODO(synk): general W -> O(W) roll chain or bf16 gather-matmul fallback.

    out_dtype = x_nchw.dtype
    Nb = min(N, 8)
    while N % Nb:
        Nb -= 1
    n_steps = N // Nb

    # Layout prep (one fused XLA op): NCHW -> NHWC, pad H only (W pad lives in the
    # banded weights), pack (w, cin) on the lane axis, cast to bf16 MXU operands.
    # TODO(synk): for very large activations fold this transpose/pad into the kernel
    # (halo DMA into a zero-initialized VMEM scratch) to drop the extra HBM pass.
    x_nhwc = jnp.transpose(x_nchw, (0, 2, 3, 1))
    xp = jnp.pad(x_nhwc, ((0, 0), (ph, ph), (0, 0), (0, 0)))
    xp = xp.reshape(N, Hp, WCin).astype(jnp.bfloat16)

    inv_m = 1.0 / float(N * H * W)

    def kernel(xp_ref, b_ref, out_ref, s1_ref):
        step = pl.program_id(0)

        @pl.when(step == 0)
        def _init():
            s1_ref[...] = jnp.zeros_like(s1_ref)

        def channel_sum(v):
            # Exact per-channel sum over the w lanes (lane layout is (w, cout)),
            # result already broadcast back across w.  XLU roll-tree, f32 adds.
            r = v
            s = Cout
            while s < WC:
                r = r + pltpu.roll(r, shift=s, axis=1)
                s *= 2
            return r

        # ---- conv: KH lane-dense banded matmuls per image, register accumulation.
        s1_local = jnp.zeros((1, WC), jnp.float32)
        for j in range(Nb):                                    # static unroll, Nb <= 8
            xv = xp_ref[j]                                     # (Hp, WCin) bf16
            acc = jnp.dot(xv[0:H, :], b_ref[0],
                          preferred_element_type=jnp.float32)
            for dy in range(1, KH):
                acc = acc + jnp.dot(xv[dy:dy + H, :], b_ref[dy],
                                    preferred_element_type=jnp.float32)
            # Stage un-normalized y in the VMEM-resident output block (no HBM trip).
            out_ref[step * Nb + j] = acc.astype(out_ref.dtype)
            s1_local = s1_local + jnp.sum(acc, axis=0, keepdims=True)
        s1_ref[...] += s1_local

        # ---- last step: batch-wide ActNorm init stats + in-place normalize (VMEM only).
        @pl.when(step == pl.num_programs(0) - 1)
        def _finalize():
            mean = channel_sum(s1_ref[...]) * inv_m            # (1, WC), per-channel
            c2 = jnp.zeros((1, WC), jnp.float32)
            for n in range(N):                                 # TODO(synk): fori_loop for large N
                d = out_ref[n].astype(jnp.float32) - mean
                c2 = c2 + jnp.sum(d * d, axis=0, keepdims=True)
            var = channel_sum(c2) * inv_m
            inv = 1.0 / (jnp.sqrt(var) + 1e-6)                 # ActNorm: scale/(sqrt(v)+eps), scale=1
            for n in range(N):
                yn = out_ref[n].astype(jnp.float32)
                out_ref[n] = ((yn - mean) * inv).astype(out_ref.dtype)

    itemsize = jnp.dtype(out_dtype).itemsize
    vmem_need = (2 * Nb * Hp * WCin * 2          # double-buffered streamed input (bf16)
                 + 2 * KH * WCin * WC * 2        # resident banded weights (allow 2 bufs)
                 + N * H * WC * itemsize         # resident output block
                 + 4 * WC + (2 << 20))           # scratch + headroom
    vmem_limit = int(min(100 << 20, max(8 << 20, 2 * vmem_need)))

    # Advisory: true conv MACs (square kernel assumed), not the banded-matrix zeros.
    conv_flops = 2 * N * H * W * Cout * Cin * KH * KH
    bytes_accessed = N * Hp * WCin * 2 + KH * WCin * WC * 2 + N * H * WC * itemsize

    out = pl.pallas_call(
        kernel,
        out_shape=jax.ShapeDtypeStruct((N, H, WC), out_dtype),
        grid_spec=pltpu.PrefetchScalarGridSpec(
            num_scalar_prefetch=0,
            grid=(n_steps,),
            in_specs=[
                pl.BlockSpec((Nb, Hp, WCin), lambda i: (i, 0, 0)),    # streamed batch chunk
                pl.BlockSpec((KH, WCin, WC), lambda i: (0, 0, 0)),    # resident weights
            ],
            out_specs=pl.BlockSpec((N, H, WC), lambda i: (0, 0, 0)),  # resident, written once
            scratch_shapes=[pltpu.VMEM((1, WC), jnp.float32)],        # per-(w,cout) running sum
        ),
        compiler_params=pltpu.CompilerParams(
            # Batch-wide ActNorm stats serialize the grid; output block is revisited.
            # TODO(synk): v7x dual-TC — split the conv phase onto a parallel axis and
            # combine stats in a tiny second pass once N is large enough to matter.
            dimension_semantics=("arbitrary",),
            vmem_limit_bytes=vmem_limit,
        ),
        cost_estimate=pl.CostEstimate(flops=conv_flops, transcendentals=0,
                                      bytes_accessed=bytes_accessed),
    )(xp, banded)

    # Back to PyTorch NCHW.
    return jnp.transpose(out.reshape(N, H, W, Cout), (0, 3, 1, 2))


def _reference(x_nchw, weight_oihw):
    """Pure-JAX reference (conv + first-batch ActNorm), matching the kernel's bf16
    operand rounding (accumulation stays f32)."""
    xb = x_nchw.astype(jnp.bfloat16).astype(jnp.float32)
    wb = weight_oihw.astype(jnp.bfloat16).astype(jnp.float32)
    y = jax.lax.conv_general_dilated(
        xb, wb, window_strides=(1, 1), padding=((1, 1), (1, 1)),
        dimension_numbers=("NCHW", "OIHW", "NCHW"),
        preferred_element_type=jnp.float32)
    mean = jnp.mean(y, axis=(0, 2, 3), keepdims=True)
    var = jnp.mean((y - mean) ** 2, axis=(0, 2, 3), keepdims=True)
    return (y - mean) * (1.0 / (jnp.sqrt(var) + 1e-6))


if __name__ == "__main__":
    key = jax.random.PRNGKey(0)
    kx, kw = jax.random.split(key)

    # Module config: Conv2d(in_channels=4, out_channels=8, kernel=(3,3), stride=(1,1),
    #                       padding='same', do_actnorm=True, weight_std=0.05)
    N, Cin, H, W = 2, 4, 16, 16
    Cout, KH, KW = 8, 3, 3
    weight_std = 0.05

    x = jax.random.normal(kx, (N, Cin, H, W), dtype=jnp.float32)
    weight = weight_std * jax.random.normal(kw, (Cout, Cin, KH, KW), dtype=jnp.float32)

    # Weight packing is hoisted out of the forward path (once per weight update).
    banded = jax.block_until_ready(pack_glow_conv_weights(weight, W))

    out = jax.jit(conv2d_glow)(x, banded)
    out = jax.block_until_ready(out)

    ref = _reference(x, weight)
    assert out.shape == (N, Cout, H, W)
    err = float(jnp.max(jnp.abs(out - ref)))
    assert jnp.allclose(out, ref, atol=3e-3, rtol=3e-3), f"max abs err {err}"

    print("KERNEL_OK")
</pallas_src>

<mosaic_0001>
module attributes {stable_mosaic.version = 11 : i64} {
  func.func @kernel(%arg0: i32, %arg1: memref<2x18x64xbf16, #tpu.memory_space<vmem>>, %arg2: memref<3x64x128xbf16, #tpu.memory_space<vmem>>, %arg3: memref<2x16x128xf32, #tpu.memory_space<vmem>>, %arg4: memref<1x128xf32, #tpu.memory_space<vmem>>) attributes {dimension_semantics = [#tpu.dimension_semantics<arbitrary>], iteration_bounds = array<i64: 1>, scalar_prefetch = 0 : i64, scratch_operands = 1 : i64, tpu.core_type = #tpu.core_type<tc>, window_params = [{transform_indices = @transform_0, window_bounds = array<i64: 2, 18, 64>}, {pipeline_mode = #tpu.pipeline_mode<synchronous>, transform_indices = @transform_1, window_bounds = array<i64: 3, 64, 128>}, {pipeline_mode = #tpu.pipeline_mode<synchronous>, transform_indices = @transform_2, window_bounds = array<i64: 2, 16, 128>}]} {
    %c0_i32 = arith.constant 0 : i32
    %0 = arith.cmpi eq, %arg0, %c0_i32 : i32
    %1 = arith.extui %0 : i1 to i32
    %c0_i32_0 = arith.constant 0 : i32
    %2 = arith.cmpi ne, %1, %c0_i32_0 : i32
    scf.if %2 {
      %cst_42 = arith.constant 0.000000e+00 : f32
      %60 = vector.broadcast %cst_42 : f32 to vector<1x128xf32>
      %c0_43 = arith.constant 0 : index
      %c0_44 = arith.constant 0 : index
      %61 = vector.load %arg4[%c0_43, %c0_44] : memref<1x128xf32, #tpu.memory_space<vmem>>, vector<1x128xf32>
      tpu.vector_store %arg4[%c0_43, %c0_44], %60 {strides = array<i32>} : memref<1x128xf32, #tpu.memory_space<vmem>>, vector<1x128xf32>,
    } else {
    }
    %cst = arith.constant 0.000000e+00 : f32
    %3 = vector.broadcast %cst : f32 to vector<1x128xf32>
    %c0 = arith.constant 0 : index
    %c0_1 = arith.constant 0 : index
    %c0_2 = arith.constant 0 : index
    %4 = vector.load %arg1[%c0, %c0_1, %c0_2] : memref<2x18x64xbf16, #tpu.memory_space<vmem>>, vector<1x18x64xbf16>
    %5 = vector.shape_cast %4 : vector<1x18x64xbf16> to vector<18x64xbf16>
    %6 = vector.extract_strided_slice %5 {offsets = [0, 0], sizes = [16, 64], strides = [1, 1]} : vector<18x64xbf16> to vector<16x64xbf16>
    %c0_3 = arith.constant 0 : index
    %c0_4 = arith.constant 0 : index
    %c0_5 = arith.constant 0 : index
    %7 = vector.load %arg2[%c0_3, %c0_4, %c0_5] : memref<3x64x128xbf16, #tpu.memory_space<vmem>>, vector<1x64x128xbf16>
    %8 = vector.shape_cast %7 : vector<1x64x128xbf16> to vector<64x128xbf16>
    %cst_6 = arith.constant dense<0.000000e+00> : vector<16x128xf32>
    %9 = tpu.matmul %6, %8, %cst_6 {dimension_numbers = #tpu.dot_dimension_numbers<[1], [0], [0], [1], [0, 0, 1, 1], [], []>} : vector<16x64xbf16>, vector<64x128xbf16>, vector<16x128xf32> -> vector<16x128xf32>
    %10 = vector.extract_strided_slice %5 {offsets = [1, 0], sizes = [16, 64], strides = [1, 1]} : vector<18x64xbf16> to vector<16x64xbf16>
    %c1 = arith.constant 1 : index
    %c0_7 = arith.constant 0 : index
    %c0_8 = arith.constant 0 : index
    %11 = vector.load %arg2[%c1, %c0_7, %c0_8] : memref<3x64x128xbf16, #tpu.memory_space<vmem>>, vector<1x64x128xbf16>
    %12 = vector.shape_cast %11 : vector<1x64x128xbf16> to vector<64x128xbf16>
    %cst_9 = arith.constant dense<0.000000e+00> : vector<16x128xf32>
    %13 = tpu.matmul %10, %12, %cst_9 {dimension_numbers = #tpu.dot_dimension_numbers<[1], [0], [0], [1], [0, 0, 1, 1], [], []>} : vector<16x64xbf16>, vector<64x128xbf16>, vector<16x128xf32> -> vector<16x128xf32>
    %14 = arith.addf %9, %13 : vector<16x128xf32>
    %15 = vector.extract_strided_slice %5 {offsets = [2, 0], sizes = [16, 64], strides = [1, 1]} : vector<18x64xbf16> to vector<16x64xbf16>
    %c2 = arith.constant 2 : index
    %c0_10 = arith.constant 0 : index
    %c0_11 = arith.constant 0 : index
    %16 = vector.load %arg2[%c2, %c0_10, %c0_11] : memref<3x64x128xbf16, #tpu.memory_space<vmem>>, vector<1x64x128xbf16>
    %17 = vector.shape_cast %16 : vector<1x64x128xbf16> to vector<64x128xbf16>
    %cst_12 = arith.constant dense<0.000000e+00> : vector<16x128xf32>
    %18 = tpu.matmul %15, %17, %cst_12 {dimension_numbers = #tpu.dot_dimension_numbers<[1], [0], [0], [1], [0, 0, 1, 1], [], []>} : vector<16x64xbf16>, vector<64x128xbf16>, vector<16x128xf32> -> vector<16x128xf32>
    %19 = arith.addf %14, %18 : vector<16x128xf32>
    %c2_i32 = arith.constant 2 : i32
    %20 = arith.muli %arg0, %c2_i32 : i32
    %c0_i32_13 = arith.constant 0 : i32
    %21 = arith.addi %20, %c0_i32_13 : i32
    %22 = arith.index_cast %21 : i32 to index
    %c0_14 = arith.constant 0 : index
    %c0_15 = arith.constant 0 : index
    %23 = vector.load %arg3[%22, %c0_14, %c0_15] : memref<2x16x128xf32, #tpu.memory_space<vmem>>, vector<1x16x128xf32>
    %24 = vector.shape_cast %23 : vector<1x16x128xf32> to vector<16x128xf32>
    %25 = vector.shape_cast %19 : vector<16x128xf32> to vector<1x16x128xf32>
    tpu.vector_store %arg3[%22, %c0_14, %c0_15], %25 {strides = array<i32>} : memref<2x16x128xf32, #tpu.memory_space<vmem>>, vector<1x16x128xf32>,
    %cst_16 = arith.constant dense<0.000000e+00> : vector<128xf32>
    %26 = vector.multi_reduction <add>, %19, %cst_16 [0] : vector<16x128xf32> to vector<128xf32>
    %27 = vector.shape_cast %26 : vector<128xf32> to vector<1x128xf32>
    %28 = arith.addf %3, %27 : vector<1x128xf32>
    %c1_17 = arith.constant 1 : index
    %c0_18 = arith.constant 0 : index
    %c0_19 = arith.constant 0 : index
    %29 = vector.load %arg1[%c1_17, %c0_18, %c0_19] : memref<2x18x64xbf16, #tpu.memory_space<vmem>>, vector<1x18x64xbf16>
    %30 = vector.shape_cast %29 : vector<1x18x64xbf16> to vector<18x64xbf16>
    %31 = vector.extract_strided_slice %30 {offsets = [0, 0], sizes = [16, 64], strides = [1, 1]} : vector<18x64xbf16> to vector<16x64xbf16>
    %c0_20 = arith.constant 0 : index
    %c0_21 = arith.constant 0 : index
    %c0_22 = arith.constant 0 : index
    %32 = vector.load %arg2[%c0_20, %c0_21, %c0_22] : memref<3x64x128xbf16, #tpu.memory_space<vmem>>, vector<1x64x128xbf16>
    %33 = vector.shape_cast %32 : vector<1x64x128xbf16> to vector<64x128xbf16>
    %cst_23 = arith.constant dense<0.000000e+00> : vector<16x128xf32>
    %34 = tpu.matmul %31, %33, %cst_23 {dimension_numbers = #tpu.dot_dimension_numbers<[1], [0], [0], [1], [0, 0, 1, 1], [], []>} : vector<16x64xbf16>, vector<64x128xbf16>, vector<16x128xf32> -> vector<16x128xf32>
    %35 = vector.extract_strided_slice %30 {offsets = [1, 0], sizes = [16, 64], strides = [1, 1]} : vector<18x64xbf16> to vector<16x64xbf16>
    %c1_24 = arith.constant 1 : index
    %c0_25 = arith.constant 0 : index
    %c0_26 = arith.constant 0 : index
    %36 = vector.load %arg2[%c1_24, %c0_25, %c0_26] : memref<3x64x128xbf16, #tpu.memory_space<vmem>>, vector<1x64x128xbf16>
    %37 = vector.shape_cast %36 : vector<1x64x128xbf16> to vector<64x128xbf16>
    %cst_27 = arith.constant dense<0.000000e+00> : vector<16x128xf32>
    %38 = tpu.matmul %35, %37, %cst_27 {dimension_numbers = #tpu.dot_dimension_numbers<[1], [0], [0], [1], [0, 0, 1, 1], [], []>} : vector<16x64xbf16>, vector<64x128xbf16>, vector<16x128xf32> -> vector<16x128xf32>
    %39 = arith.addf %34, %38 : vector<16x128xf32>
    %40 = vector.extract_strided_slice %30 {offsets = [2, 0], sizes = [16, 64], strides = [1, 1]} : vector<18x64xbf16> to vector<16x64xbf16>
    %c2_28 = arith.constant 2 : index
    %c0_29 = arith.constant 0 : index
    %c0_30 = arith.constant 0 : index
    %41 = vector.load %arg2[%c2_28, %c0_29, %c0_30] : memref<3x64x128xbf16, #tpu.memory_space<vmem>>, vector<1x64x128xbf16>
    %42 = vector.shape_cast %41 : vector<1x64x128xbf16> to vector<64x128xbf16>
    %cst_31 = arith.constant dense<0.000000e+00> : vector<16x128xf32>
    %43 = tpu.matmul %40, %42, %cst_31 {dimension_numbers = #tpu.dot_dimension_numbers<[1], [0], [0], [1], [0, 0, 1, 1], [], []>} : vector<16x64xbf16>, vector<64x128xbf16>, vector<16x128xf32> -> vector<16x128xf32>
    %44 = arith.addf %39, %43 : vector<16x128xf32>
    %c2_i32_32 = arith.constant 2 : i32
    %45 = arith.muli %arg0, %c2_i32_32 : i32
    %c1_i32 = arith.constant 1 : i32
    %46 = arith.addi %45, %c1_i32 : i32
    %47 = arith.index_cast %46 : i32 to index
    %c0_33 = arith.constant 0 : index
    %c0_34 = arith.constant 0 : index
    %48 = vector.load %arg3[%47, %c0_33, %c0_34] : memref<2x16x128xf32, #tpu.memory_space<vmem>>, vector<1x16x128xf32>
    %49 = vector.shape_cast %48 : vector<1x16x128xf32> to vector<16x128xf32>
    %50 = vector.shape_cast %44 : vector<16x128xf32> to vector<1x16x128xf32>
    tpu.vector_store %arg3[%47, %c0_33, %c0_34], %50 {strides = array<i32>} : memref<2x16x128xf32, #tpu.memory_space<vmem>>, vector<1x16x128xf32>,
    %cst_35 = arith.constant dense<0.000000e+00> : vector<128xf32>
    %51 = vector.multi_reduction <add>, %44, %cst_35 [0] : vector<16x128xf32> to vector<128xf32>
    %52 = vector.shape_cast %51 : vector<128xf32> to vector<1x128xf32>
    %53 = arith.addf %28, %52 : vector<1x128xf32>
    %c0_36 = arith.constant 0 : index
    %c0_37 = arith.constant 0 : index
    %54 = vector.load %arg4[%c0_36, %c0_37] : memref<1x128xf32, #tpu.memory_space<vmem>>, vector<1x128xf32>
    %55 = arith.addf %54, %53 : vector<1x128xf32>
    %c0_38 = arith.constant 0 : index
    %c0_39 = arith.constant 0 : index
    %56 = vector.load %arg4[%c0_38, %c0_39] : memref<1x128xf32, #tpu.memory_space<vmem>>, vector<1x128xf32>
    tpu.vector_store %arg4[%c0_38, %c0_39], %55 {strides = array<i32>} : memref<1x128xf32, #tpu.memory_space<vmem>>, vector<1x128xf32>,
    %c0_i32_40 = arith.constant 0 : i32
    %57 = arith.cmpi eq, %arg0, %c0_i32_40 : i32
    %58 = arith.extui %57 : i1 to i32
    %c0_i32_41 = arith.constant 0 : i32
    %59 = arith.cmpi ne, %58, %c0_i32_41 : i32
    scf.if %59 {
      %c0_42 = arith.constant 0 : index
      %c0_43 = arith.constant 0 : index
      %60 = vector.load %arg4[%c0_42, %c0_43] : memref<1x128xf32, #tpu.memory_space<vmem>>, vector<1x128xf32>
      %c8_i32 = arith.constant 8 : i32
      %61 = tpu.dynamic_rotate %60 by %c8_i32 dim 1 : vector<1x128xf32>, i32 -> vector<1x128xf32>
      %62 = arith.addf %60, %61 : vector<1x128xf32>
      %c16_i32 = arith.constant 16 : i32
      %63 = tpu.dynamic_rotate %62 by %c16_i32 dim 1 : vector<1x128xf32>, i32 -> vector<1x128xf32>
      %64 = arith.addf %62, %63 : vector<1x128xf32>
      %c32_i32 = arith.constant 32 : i32
      %65 = tpu.dynamic_rotate %64 by %c32_i32 dim 1 : vector<1x128xf32>, i32 -> vector<1x128xf32>
      %66 = arith.addf %64, %65 : vector<1x128xf32>
      %c64_i32 = arith.constant 64 : i32
      %67 = tpu.dynamic_rotate %66 by %c64_i32 dim 1 : vector<1x128xf32>, i32 -> vector<1x128xf32>
      %68 = arith.addf %66, %67 : vector<1x128xf32>
      %cst_44 = arith.constant 0.001953125 : f32
      %69 = vector.broadcast %cst_44 : f32 to vector<1x128xf32>
      %70 = arith.mulf %68, %69 : vector<1x128xf32>
      %cst_45 = arith.constant 0.000000e+00 : f32
      %71 = vector.broadcast %cst_45 : f32 to vector<1x128xf32>
      %c0_46 = arith.constant 0 : index
      %c0_47 = arith.constant 0 : index
      %c0_48 = arith.constant 0 : index
      %72 = vector.load %arg3[%c0_46, %c0_47, %c0_48] : memref<2x16x128xf32, #tpu.memory_space<vmem>>, vector<1x16x128xf32>
      %73 = vector.shape_cast %72 : vector<1x16x128xf32> to vector<16x128xf32>
      %74 = vector.broadcast %70 : vector<1x128xf32> to vector<16x128xf32>
      %75 = arith.subf %73, %74 : vector<16x128xf32>
      %76 = arith.mulf %75, %75 : vector<16x128xf32>
      %cst_49 = arith.constant dense<0.000000e+00> : vector<128xf32>
      %77 = vector.multi_reduction <add>, %76, %cst_49 [0] : vector<16x128xf32> to vector<128xf32>
      %78 = vector.shape_cast %77 : vector<128xf32> to vector<1x128xf32>
      %79 = arith.addf %71, %78 : vector<1x128xf32>
      %c1_50 = arith.constant 1 : index
      %c0_51 = arith.constant 0 : index
      %c0_52 = arith.constant 0 : index
      %80 = vector.load %arg3[%c1_50, %c0_51, %c0_52] : memref<2x16x128xf32, #tpu.memory_space<vmem>>, vector<1x16x128xf32>
      %81 = vector.shape_cast %80 : vector<1x16x128xf32> to vector<16x128xf32>
      %82 = vector.broadcast %70 : vector<1x128xf32> to vector<16x128xf32>
      %83 = arith.subf %81, %82 : vector<16x128xf32>
      %84 = arith.mulf %83, %83 : vector<16x128xf32>
      %cst_53 = arith.constant dense<0.000000e+00> : vector<128xf32>
      %85 = vector.multi_reduction <add>, %84, %cst_53 [0] : vector<16x128xf32> to vector<128xf32>
      %86 = vector.shape_cast %85 : vector<128xf32> to vector<1x128xf32>
      %87 = arith.addf %79, %86 : vector<1x128xf32>
      %c8_i32_54 = arith.constant 8 : i32
      %88 = tpu.dynamic_rotate %87 by %c8_i32_54 dim 1 : vector<1x128xf32>, i32 -> vector<1x128xf32>
      %89 = arith.addf %87, %88 : vector<1x128xf32>
      %c16_i32_55 = arith.constant 16 : i32
      %90 = tpu.dynamic_rotate %89 by %c16_i32_55 dim 1 : vector<1x128xf32>, i32 -> vector<1x128xf32>
      %91 = arith.addf %89, %90 : vector<1x128xf32>
      %c32_i32_56 = arith.constant 32 : i32
      %92 = tpu.dynamic_rotate %91 by %c32_i32_56 dim 1 : vector<1x128xf32>, i32 -> vector<1x128xf32>
      %93 = arith.addf %91, %92 : vector<1x128xf32>
      %c64_i32_57 = arith.constant 64 : i32
      %94 = tpu.dynamic_rotate %93 by %c64_i32_57 dim 1 : vector<1x128xf32>, i32 -> vector<1x128xf32>
      %95 = arith.addf %93, %94 : vector<1x128xf32>
      %cst_58 = arith.constant 0.001953125 : f32
      %96 = vector.broadcast %cst_58 : f32 to vector<1x128xf32>
      %97 = arith.mulf %95, %96 : vector<1x128xf32>
      %98 = math.sqrt %97 : vector<1x128xf32>
      %cst_59 = arith.constant 9.99999997E-7 : f32
      %99 = vector.broadcast %cst_59 : f32 to vector<1x128xf32>
      %100 = arith.addf %98, %99 : vector<1x128xf32>
      %cst_60 = arith.constant 1.000000e+00 : f32
      %101 = vector.broadcast %cst_60 : f32 to vector<1x128xf32>
      %102 = arith.divf %101, %100 : vector<1x128xf32>
      %c0_61 = arith.constant 0 : index
      %c0_62 = arith.constant 0 : index
      %c0_63 = arith.constant 0 : index
      %103 = vector.load %arg3[%c0_61, %c0_62, %c0_63] : memref<2x16x128xf32, #tpu.memory_space<vmem>>, vector<1x16x128xf32>
      %104 = vector.shape_cast %103 : vector<1x16x128xf32> to vector<16x128xf32>
      %105 = vector.broadcast %70 : vector<1x128xf32> to vector<16x128xf32>
      %106 = arith.subf %104, %105 : vector<16x128xf32>
      %107 = vector.broadcast %102 : vector<1x128xf32> to vector<16x128xf32>
      %108 = arith.mulf %106, %107 : vector<16x128xf32>
      %c0_64 = arith.constant 0 : index
      %c0_65 = arith.constant 0 : index
      %c0_66 = arith.constant 0 : index
      %109 = vector.load %arg3[%c0_64, %c0_65, %c0_66] : memref<2x16x128xf32, #tpu.memory_space<vmem>>, vector<1x16x128xf32>
      %110 = vector.shape_cast %109 : vector<1x16x128xf32> to vector<16x128xf32>
      %111 = vector.shape_cast %108 : vector<16x128xf32> to vector<1x16x128xf32>
      tpu.vector_store %arg3[%c0_64, %c0_65, %c0_66], %111 {strides = array<i32>} : memref<2x16x128xf32, #tpu.memory_space<vmem>>, vector<1x16x128xf32>,
      %c1_67 = arith.constant 1 : index
      %c0_68 = arith.constant 0 : index
      %c0_69 = arith.constant 0 : index
      %112 = vector.load %arg3[%c1_67, %c0_68, %c0_69] : memref<2x16x128xf32, #tpu.memory_space<vmem>>, vector<1x16x128xf32>
      %113 = vector.shape_cast %112 : vector<1x16x128xf32> to vector<16x128xf32>
      %114 = vector.broadcast %70 : vector<1x128xf32> to vector<16x128xf32>
      %115 = arith.subf %113, %114 : vector<16x128xf32>
      %116 = vector.broadcast %102 : vector<1x128xf32> to vector<16x128xf32>
      %117 = arith.mulf %115, %116 : vector<16x128xf32>
      %c1_70 = arith.constant 1 : index
      %c0_71 = arith.constant 0 : index
      %c0_72 = arith.constant 0 : index
      %118 = vector.load %arg3[%c1_70, %c0_71, %c0_72] : memref<2x16x128xf32, #tpu.memory_space<vmem>>, vector<1x16x128xf32>
      %119 = vector.shape_cast %118 : vector<1x16x128xf32> to vector<16x128xf32>
      %120 = vector.shape_cast %117 : vector<16x128xf32> to vector<1x16x128xf32>
      tpu.vector_store %arg3[%c1_70, %c0_71, %c0_72], %120 {strides = array<i32>} : memref<2x16x128xf32, #tpu.memory_space<vmem>>, vector<1x16x128xf32>,
    } else {
    }
    return
  }
  func.func @transform_0(%arg0: i32) -> (i32, i32, i32) {
    %c0_i32 = arith.constant 0 : i32
    %c0_i32_0 = arith.constant 0 : i32
    %c0_i32_1 = arith.constant 0 : i32
    return %arg0, %c0_i32, %c0_i32_0 : i32, i32, i32
  }
  func.func @transform_1(%arg0: i32) -> (i32, i32, i32) {
    %c0_i32 = arith.constant 0 : i32
    %c0_i32_0 = arith.constant 0 : i32
    %c0_i32_1 = arith.constant 0 : i32
    %c0_i32_2 = arith.constant 0 : i32
    return %c0_i32, %c0_i32_0, %c0_i32_1 : i32, i32, i32
  }
  func.func @transform_2(%arg0: i32) -> (i32, i32, i32) {
    %c0_i32 = arith.constant 0 : i32
    %c0_i32_0 = arith.constant 0 : i32
    %c0_i32_1 = arith.constant 0 : i32
    %c0_i32_2 = arith.constant 0 : i32
    return %c0_i32, %c0_i32_0, %c0_i32_1 : i32, i32, i32
  }
}

</mosaic_0001>

<llo_original>
// kernel: conv2d_glow.1
$region0: #{conv2d_glow.1}
  #allocation0 [shape = 'u32[]', space=smem, size = 0x4, offset = 0x4, fixed_abs, tag = 'smem constant byte address 0x4 - core index']
  #allocation1 [shape = 'u32[72,128]{1,0:T(1,128)}', space=vmem, size = 0x9000, scoped, tag = 'internal scratch']
  #allocation2 [shape = 'f32[1,128]{1,0:T(1,128)}', space=vmem, size = 0x200, scoped, tag = 'scratch operand']
  %s0 = inlined_call_operand.vmem [shape: bf16[2,18,64], index: 0, kind: input, shape index: {}]
  %s1 = inlined_call_operand.vmem [shape: bf16[3,64,128], index: 1, kind: input, shape index: {}]
  %s2 = inlined_call_operand.vmem [shape: f32[2,16,128], index: 2, kind: output, shape index: {}]
  %s3 = sld [smem:[#allocation0]]
  $region26: #{conv2d_glow.1} parent=0
    _
  %s5 = ssub.s32 1, %s3
  %s6 = scalar_select 0, %s5, %s3
  // Predicated region
  $region2: #{conv2d_glow.1} parent=0 // pred_check
    _
  $region3: #{conv2d_glow.1} parent=0 // pred_check_branch
    %8 = sbr.rel (0) target = $region5
  $region4: #{conv2d_glow.1} parent=0 // pred_region
    _
  $region5: #{conv2d_glow.1} parent=0 // pred_fallthru
    _
  // Predicated region
  $region6: #{conv2d_glow.1} parent=0 // pred_check
    _
  $region7: #{conv2d_glow.1} parent=0 // pred_check_branch
    %10 = sbr.rel (0) target = $region9
  $region8: #{conv2d_glow.1} parent=0 // pred_region
    _
  $region9: #{conv2d_glow.1} parent=0 // pred_fallthru
    _
  %p12 = scmp.eq.s32.totalorder 0, 0
  // Predicated region
  $region10: #{conv2d_glow.1} parent=0 // pred_check
    %p13 = pneg %p12
  $region11: #{conv2d_glow.1} parent=0 // pred_check_branch
    %15 = sbr.rel (%p13) target = $region13
  $region12: #{conv2d_glow.1} parent=0 // pred_region
    %16 = vst [vmem:[#allocation2] sm:$0x1] 0.0
  $region13: #{conv2d_glow.1} parent=0 // pred_fallthru
    _
  %v17 = vld [vmem:[%s0] sm:$0xf]
  %v18 = vld [vmem:[%s0 + $0x4] sm:$0xf]
  %v19 = vld [vmem:[%s0 + $0x8] sm:$0x1]
  %v20 = vld [vmem:[%s1] sm:$0xf]
  %v21 = vld [vmem:[%s1 + $0x4] sm:$0xf]
  %v22 = vld [vmem:[%s1 + $0x8] sm:$0xf]
  %v23 = vld [vmem:[%s1 + $0xc] sm:$0xf]
  %v24 = vld [vmem:[%s1 + $0x10] sm:$0xf]
  %v25 = vld [vmem:[%s1 + $0x14] sm:$0xf]
  %v26 = vld [vmem:[%s1 + $0x18] sm:$0xf]
  %v27 = vld [vmem:[%s1 + $0x1c] sm:$0xf]
  %s28 = scalar_lea.vmem %s1, 32
  %v29 = vld [vmem:[%s28] sm:$0xf]
  %v30 = vld [vmem:[%s28 + $0x4] sm:$0xf]
  %v31 = vld [vmem:[%s28 + $0x8] sm:$0xf]
  %v32 = vld [vmem:[%s28 + $0xc] sm:$0xf]
  %v33 = vld [vmem:[%s28 + $0x10] sm:$0xf]
  %v34 = vld [vmem:[%s28 + $0x14] sm:$0xf]
  %v35 = vld [vmem:[%s28 + $0x18] sm:$0xf]
  %v36 = vld [vmem:[%s28 + $0x1c] sm:$0xf]
  %v40 = vunpack.c.l.b16 %v17
  %v41 = vunpack.c.l.b16 %v18
  %v42 = vunpack.c.l.b16 %v19
  %v43 = vpack.c.b16 %v41, %v40
  %v44 = vpack.c.b16 %v42, %v42
  %vm45 = vsmask.f32 7424
  %v47 = vshrl.u32 %v43, 16
  %v49 = vshll.u32 %v43, 16
  %v51 = vrot.slane %v49, 1
  %v52 = vor.u32 %v47, %v51
  %v54 = vshll.u32 %v44, 16
  %v56 = vrot.slane %v54, 1
  %v57 = vsel %vm45, %v52, %v56
  %v66 = vunpack.c.l.b16 %v29
  %v67 = vunpack.c.l.b16 %v30
  %v68 = vunpack.c.l.b16 %v31
  %v69 = vunpack.c.l.b16 %v32
  %v70 = vunpack.c.l.b16 %v33
  %v71 = vunpack.c.l.b16 %v34
  %v72 = vunpack.c.l.b16 %v35
  %v73 = vunpack.c.l.b16 %v36
  %v74 = vpack.c.b16 %v67, %v66
  %v75 = vpack.c.b16 %v69, %v68
  %v76 = vpack.c.b16 %v71, %v70
  %v77 = vpack.c.b16 %v73, %v72
  %vm82 = vcmask 523264
  %v84 = vsel %vm82, %v57, 0
  %86 = vmatpush.bf16.msra.mxu0 0
  %87 = vmatpush.bf16.msra.mxu0 0
  %88 = vmatpush.bf16.msra.mxu0 0
  %89 = vmatpush.bf16.msra.mxu0 0
  %90 = vmatpush.bf16.msra.mxu0 %v77
  %91 = vmatpush.bf16.msra.mxu0 %v76
  %92 = vmatpush.bf16.msra.mxu0 %v75
  %93 = vmatpush.bf16.msra.mxu0 %v74
  %94 = vmatmul.bf16.gmra.mxu0 %v84
  %v95 = vpop.f32.mrf.mxu0
  %v96 = vadd.f32 0.0, %v95
  %v97 = vpop.f32.mrf.mxu0
  %v98 = vadd.f32 0.0, %v97
  %99 = vdwg.mxu0
  %v108 = vunpack.c.l.b16 %v20
  %v109 = vunpack.c.l.b16 %v21
  %v110 = vunpack.c.l.b16 %v22
  %v111 = vunpack.c.l.b16 %v23
  %v112 = vunpack.c.l.b16 %v24
  %v113 = vunpack.c.l.b16 %v25
  %v114 = vunpack.c.l.b16 %v26
  %v115 = vunpack.c.l.b16 %v27
  %v116 = vpack.c.b16 %v109, %v108
  %v117 = vpack.c.b16 %v111, %v110
  %v118 = vpack.c.b16 %v113, %v112
  %v119 = vpack.c.b16 %v115, %v114
  %v124 = vsel %vm82, %v43, 0
  %126 = vmatpush.bf16.msra.mxu0 0
  %127 = vmatpush.bf16.msra.mxu0 0
  %128 = vmatpush.bf16.msra.mxu0 0
  %129 = vmatpush.bf16.msra.mxu0 0
  %130 = vmatpush.bf16.msra.mxu0 %v119
  %131 = vmatpush.bf16.msra.mxu0 %v118
  %132 = vmatpush.bf16.msra.mxu0 %v117
  %133 = vmatpush.bf16.msra.mxu0 %v116
  %134 = vmatmul.bf16.gmra.mxu0 %v124
  %v135 = vpop.f32.mrf.mxu0
  %v136 = vadd.f32 %v96, %v135
  %v137 = vpop.f32.mrf.mxu0
  %v138 = vadd.f32 %v98, %v137
  %139 = vdwg.mxu0
  %s140 = scalar_lea.vmem %s1, 64
  %v141 = vld [vmem:[%s140] sm:$0xf]
  %v142 = vld [vmem:[%s140 + $0x4] sm:$0xf]
  %v143 = vld [vmem:[%s140 + $0x8] sm:$0xf]
  %v144 = vld [vmem:[%s140 + $0xc] sm:$0xf]
  %v145 = vld [vmem:[%s140 + $0x10] sm:$0xf]
  %v146 = vld [vmem:[%s140 + $0x14] sm:$0xf]
  %v147 = vld [vmem:[%s140 + $0x18] sm:$0xf]
  %v148 = vld [vmem:[%s140 + $0x1c] sm:$0xf]
  %vm149 = vcmask 1046528
  %v150 = vrot.slane %v43, 1
  %v151 = vrot.slane %v44, 1
  %v152 = vsel %vm149, %v150, %v151
  %v161 = vunpack.c.l.b16 %v141
  %v162 = vunpack.c.l.b16 %v142
  %v163 = vunpack.c.l.b16 %v143
  %v164 = vunpack.c.l.b16 %v144
  %v165 = vunpack.c.l.b16 %v145
  %v166 = vunpack.c.l.b16 %v146
  %v167 = vunpack.c.l.b16 %v147
  %v168 = vunpack.c.l.b16 %v148
  %v169 = vpack.c.b16 %v162, %v161
  %v170 = vpack.c.b16 %v164, %v163
  %v171 = vpack.c.b16 %v166, %v165
  %v172 = vpack.c.b16 %v168, %v167
  %v178 = vsel %vm82, %v152, 0
  %180 = vmatpush.bf16.msra.mxu0 0
  %181 = vmatpush.bf16.msra.mxu0 0
  %182 = vmatpush.bf16.msra.mxu0 0
  %183 = vmatpush.bf16.msra.mxu0 0
  %184 = vmatpush.bf16.msra.mxu0 %v172
  %185 = vmatpush.bf16.msra.mxu0 %v171
  %186 = vmatpush.bf16.msra.mxu0 %v170
  %187 = vmatpush.bf16.msra.mxu0 %v169
  %188 = vmatmul.bf16.gmra.mxu0 %v178
  %v189 = vpop.f32.mrf.mxu0
  %v190 = vadd.f32 0.0, %v189
  %v191 = vpop.f32.mrf.mxu0
  %v192 = vadd.f32 0.0, %v191
  %193 = vdwg.mxu0
  %v194 = vadd.f32 %v136, %v190
  %v195 = vadd.f32 %v138, %v192
  %s196 = smul.u32 0, 2
  %s197 = smul.u32 %s196, 16
  %s198 = scalar_lea.vmem %s2, %s197
  %199 = vst [vmem:[%s198] sm:$0xff] %v194
  %200 = vst [vmem:[%s198 + $0x8] sm:$0xff] %v195
  %v201 = vadd.f32 %v194, %v195
  %v202 = vrot.slane %v201, 4
  %v203 = vadd.f32 %v201, %v202
  %v204 = vrot.slane %v203, 2
  %v205 = vadd.f32 %v203, %v204
  %v206 = vrot.slane %v205, 1
  %v207 = vadd.f32 %v205, %v206
  %v208 = vadd.f32 %v207, 0.0
  %s209 = scalar_lea.vmem %s0, 12
  %v210 = vld [vmem:[%s209] sm:$0xf]
  %v211 = vld [vmem:[%s209 + $0x4] sm:$0xf]
  %v212 = vld [vmem:[%s209 + $0x8] sm:$0x1]
  %v213 = vld [vmem:[%s1] sm:$0xf]
  %v214 = vld [vmem:[%s1 + $0x4] sm:$0xf]
  %v215 = vld [vmem:[%s1 + $0x8] sm:$0xf]
  %v216 = vld [vmem:[%s1 + $0xc] sm:$0xf]
  %v217 = vld [vmem:[%s1 + $0x10] sm:$0xf]
  %v218 = vld [vmem:[%s1 + $0x14] sm:$0xf]
  %v219 = vld [vmem:[%s1 + $0x18] sm:$0xf]
  %v220 = vld [vmem:[%s1 + $0x1c] sm:$0xf]
  %v221 = vld [vmem:[%s28] sm:$0xf]
  %v222 = vld [vmem:[%s28 + $0x4] sm:$0xf]
  %v223 = vld [vmem:[%s28 + $0x8] sm:$0xf]
  %v224 = vld [vmem:[%s28 + $0xc] sm:$0xf]
  %v225 = vld [vmem:[%s28 + $0x10] sm:$0xf]
  %v226 = vld [vmem:[%s28 + $0x14] sm:$0xf]
  %v227 = vld [vmem:[%s28 + $0x18] sm:$0xf]
  %v228 = vld [vmem:[%s28 + $0x1c] sm:$0xf]
  %v232 = vunpack.c.l.b16 %v210
  %v233 = vunpack.c.l.b16 %v211
  %v234 = vunpack.c.l.b16 %v212
  %v235 = vpack.c.b16 %v233, %v232
  %v236 = vpack.c.b16 %v234, %v234
  %v238 = vshrl.u32 %v235, 16
  %v240 = vshll.u32 %v235, 16
  %v242 = vrot.slane %v240, 1
  %v243 = vor.u32 %v238, %v242
  %v245 = vshll.u32 %v236, 16
  %v247 = vrot.slane %v245, 1
  %v248 = vsel %vm45, %v243, %v247
  %v257 = vunpack.c.l.b16 %v221
  %v258 = vunpack.c.l.b16 %v222
  %v259 = vunpack.c.l.b16 %v223
  %v260 = vunpack.c.l.b16 %v224
  %v261 = vunpack.c.l.b16 %v225
  %v262 = vunpack.c.l.b16 %v226
  %v263 = vunpack.c.l.b16 %v227
  %v264 = vunpack.c.l.b16 %v228
  %v265 = vpack.c.b16 %v258, %v257
  %v266 = vpack.c.b16 %v260, %v259
  %v267 = vpack.c.b16 %v262, %v261
  %v268 = vpack.c.b16 %v264, %v263
  %v274 = vsel %vm82, %v248, 0
  %276 = vmatpush.bf16.msra.mxu0 0
  %277 = vmatpush.bf16.msra.mxu0 0
  %278 = vmatpush.bf16.msra.mxu0 0
  %279 = vmatpush.bf16.msra.mxu0 0
  %280 = vmatpush.bf16.msra.mxu0 %v268
  %281 = vmatpush.bf16.msra.mxu0 %v267
  %282 = vmatpush.bf16.msra.mxu0 %v266
  %283 = vmatpush.bf16.msra.mxu0 %v265
  %284 = vmatmul.bf16.gmra.mxu0 %v274
  %v285 = vpop.f32.mrf.mxu0
  %v286 = vadd.f32 0.0, %v285
  %v287 = vpop.f32.mrf.mxu0
  %v288 = vadd.f32 0.0, %v287
  %289 = vdwg.mxu0
  %v298 = vunpack.c.l.b16 %v213
  %v299 = vunpack.c.l.b16 %v214
  %v300 = vunpack.c.l.b16 %v215
  %v301 = vunpack.c.l.b16 %v216
  %v302 = vunpack.c.l.b16 %v217
  %v303 = vunpack.c.l.b16 %v218
  %v304 = vunpack.c.l.b16 %v219
  %v305 = vunpack.c.l.b16 %v220
  %v306 = vpack.c.b16 %v299, %v298
  %v307 = vpack.c.b16 %v301, %v300
  %v308 = vpack.c.b16 %v303, %v302
  %v309 = vpack.c.b16 %v305, %v304
  %v314 = vsel %vm82, %v235, 0
  %316 = vmatpush.bf16.msra.mxu0 0
  %317 = vmatpush.bf16.msra.mxu0 0
  %318 = vmatpush.bf16.msra.mxu0 0
  %319 = vmatpush.bf16.msra.mxu0 0
  %320 = vmatpush.bf16.msra.mxu0 %v309
  %321 = vmatpush.bf16.msra.mxu0 %v308
  %322 = vmatpush.bf16.msra.mxu0 %v307
  %323 = vmatpush.bf16.msra.mxu0 %v306
  %324 = vmatmul.bf16.gmra.mxu0 %v314
  %v325 = vpop.f32.mrf.mxu0
  %v326 = vadd.f32 %v286, %v325
  %v327 = vpop.f32.mrf.mxu0
  %v328 = vadd.f32 %v288, %v327
  %329 = vdwg.mxu0
  %v330 = vld [vmem:[%s140] sm:$0xf]
  %v331 = vld [vmem:[%s140 + $0x4] sm:$0xf]
  %v332 = vld [vmem:[%s140 + $0x8] sm:$0xf]
  %v333 = vld [vmem:[%s140 + $0xc] sm:$0xf]
  %v334 = vld [vmem:[%s140 + $0x10] sm:$0xf]
  %v335 = vld [vmem:[%s140 + $0x14] sm:$0xf]
  %v336 = vld [vmem:[%s140 + $0x18] sm:$0xf]
  %v337 = vld [vmem:[%s140 + $0x1c] sm:$0xf]
  %v338 = vrot.slane %v235, 1
  %v339 = vrot.slane %v236, 1
  %v340 = vsel %vm149, %v338, %v339
  %v349 = vunpack.c.l.b16 %v330
  %v350 = vunpack.c.l.b16 %v331
  %v351 = vunpack.c.l.b16 %v332
  %v352 = vunpack.c.l.b16 %v333
  %v353 = vunpack.c.l.b16 %v334
  %v354 = vunpack.c.l.b16 %v335
  %v355 = vunpack.c.l.b16 %v336
  %v356 = vunpack.c.l.b16 %v337
  %v357 = vpack.c.b16 %v350, %v349
  %v358 = vpack.c.b16 %v352, %v351
  %v359 = vpack.c.b16 %v354, %v353
  %v360 = vpack.c.b16 %v356, %v355
  %v366 = vsel %vm82, %v340, 0
  %368 = vmatpush.bf16.msra.mxu0 0
  %369 = vmatpush.bf16.msra.mxu0 0
  %370 = vmatpush.bf16.msra.mxu0 0
  %371 = vmatpush.bf16.msra.mxu0 0
  %372 = vmatpush.bf16.msra.mxu0 %v360
  %373 = vmatpush.bf16.msra.mxu0 %v359
  %374 = vmatpush.bf16.msra.mxu0 %v358
  %375 = vmatpush.bf16.msra.mxu0 %v357
  %376 = vmatmul.bf16.gmra.mxu0 %v366
  %v377 = vpop.f32.mrf.mxu0
  %v378 = vadd.f32 0.0, %v377
  %v379 = vpop.f32.mrf.mxu0
  %v380 = vadd.f32 0.0, %v379
  %381 = vdwg.mxu0
  %v382 = vadd.f32 %v326, %v378
  %v383 = vadd.f32 %v328, %v380
  %s384 = sadd.s32 %s196, 1
  %s385 = smul.u32 %s384, 16
  %s386 = scalar_lea.vmem %s2, %s385
  %387 = vst [vmem:[%s386] sm:$0xff] %v382
  %388 = vst [vmem:[%s386 + $0x8] sm:$0xff] %v383
  %v389 = vadd.f32 %v382, %v383
  %v390 = vrot.slane %v389, 4
  %v391 = vadd.f32 %v389, %v390
  %v392 = vrot.slane %v391, 2
  %v393 = vadd.f32 %v391, %v392
  %v394 = vrot.slane %v393, 1
  %v395 = vadd.f32 %v393, %v394
  %v396 = vadd.f32 %v208, %v395
  %v397 = vld [vmem:[#allocation2] sm:$0x1]
  %v398 = vadd.f32 %v397, %v396
  %399 = vst [vmem:[#allocation2] sm:$0x1] %v398
  // Predicated region
  $region14: #{conv2d_glow.1} parent=0 // pred_check
    %p400 = pneg %p12
  $region15: #{conv2d_glow.1} parent=0 // pred_check_branch
    %402 = sbr.rel (%p400) target = $region17
  $region16: #{conv2d_glow.1} parent=0 // pred_region
    %v403 = vld [vmem:[#allocation2] sm:$0x1]
    %404 = vrot.lane.b32.xlu0 %v403, 8
    %v405 = vpop.permute.xlu0 %404
    %v406 = vadd.f32 %v403, %v405
    %407 = vrot.lane.b32.xlu0 %v406, 16
    %v408 = vpop.permute.xlu0 %407
    %v409 = vadd.f32 %v406, %v408
    %410 = vrot.lane.b32.xlu0 %v409, 32
    %v411 = vpop.permute.xlu0 %410
    %v412 = vadd.f32 %v409, %v411
    %413 = vrot.lane.b32.xlu0 %v412, 64
    %v414 = vpop.permute.xlu0 %413
    %v415 = vadd.f32 %v412, %v414
    %v416 = vmul.f32 %v415, 0.001953125
    %v417 = vld [vmem:[%s2] sm:$0xff]
    %v418 = vld [vmem:[%s2 + $0x8] sm:$0xff]
    %v420 = vperm.slane %v416, 0
    %v422 = vsub.f32 %v417, %v420
    %v423 = vsub.f32 %v418, %v420
    %v424 = vmul.f32 %v422, %v422
    %v425 = vmul.f32 %v423, %v423
    %v426 = vadd.f32 %v424, %v425
    %v427 = vrot.slane %v426, 4
    %v428 = vadd.f32 %v426, %v427
    %v429 = vrot.slane %v428, 2
    %v430 = vadd.f32 %v428, %v429
    %v431 = vrot.slane %v430, 1
    %v432 = vadd.f32 %v430, %v431
    %v433 = vadd.f32 %v432, 0.0
    %s434 = scalar_lea.vmem %s2, 16
    %v435 = vld [vmem:[%s434] sm:$0xff]
    %v436 = vld [vmem:[%s434 + $0x8] sm:$0xff]
    %v437 = vsub.f32 %v435, %v420
    %v438 = vsub.f32 %v436, %v420
    %v439 = vmul.f32 %v437, %v437
    %v440 = vmul.f32 %v438, %v438
    %v441 = vadd.f32 %v439, %v440
    %v442 = vrot.slane %v441, 4
    %v443 = vadd.f32 %v441, %v442
    %v444 = vrot.slane %v443, 2
    %v445 = vadd.f32 %v443, %v444
    %v446 = vrot.slane %v445, 1
    %v447 = vadd.f32 %v445, %v446
    %v448 = vadd.f32 %v433, %v447
    %449 = vrot.lane.b32.xlu0 %v448, 8
    %v450 = vpop.permute.xlu0 %449
    %v451 = vadd.f32 %v448, %v450
    %452 = vrot.lane.b32.xlu0 %v451, 16
    %v453 = vpop.permute.xlu0 %452
    %v454 = vadd.f32 %v451, %v453
    %455 = vrot.lane.b32.xlu0 %v454, 32
    %v456 = vpop.permute.xlu0 %455
    %v457 = vadd.f32 %v454, %v456
    %458 = vrot.lane.b32.xlu0 %v457, 64
    %v459 = vpop.permute.xlu0 %458
    %v460 = vadd.f32 %v457, %v459
    %v461 = vmul.f32 %v460, 0.001953125
    %v462 = vrsqrt.pop %v461
    %v463 = vmul.f32 %v462, %v461
    %v464 = vmul.f32 %v463, %v462
    %v465 = vmul.f32 0.5, %v464
    %v466 = vsub.f32 1.5, %v465
    %v467 = vmul.f32 %v462, %v466
    %v468 = vmul.f32 %v461, %v467
    %vm469 = vcmp.eq.f32.partialorder %v461, inf
    %v470 = vsel %vm469, %v461, %v468
    %vm471 = vcmp.eq.f32.partialorder %v461, 0.0
    %v472 = vand.u32 %v461, 2147483648
    %v473 = vsel %vm471, %v472, %v470
    %v474 = vadd.f32 %v473, 1e-06
    %v475 = vrcp.pop %v474
    %v476 = vmul.f32 %v474, %v475
    %v477 = vsub.f32 1.0, %v476
    %v478 = vmul.f32 %v475, %v477
    %v479 = vadd.f32 %v475, %v478
    %vm480 = vweird.f32 %v474
    %vm481 = vweird.f32 %v475
    %vm482 = vmor %vm480, %vm481
    %v483 = vsel %vm482, %v475, %v479
    %v484 = vand.u32 2147483647, %v474
    %vm485 = vcmp.eq.f32.partialorder %v484, 8.507059e+37
    %v486 = vand.u32 %v474, 2147483648
    %v487 = vor.u32 1.1754944e-38, %v486
    %v488 = vsel %vm485, %v487, %v483
    %v489 = vmul.f32 1.0, %v488
    %v490 = vperm.slane %v489, 0
    %v491 = vmul.f32 %v422, %v490
    %v492 = vmul.f32 %v423, %v490
    %493 = vst [vmem:[%s2] sm:$0xff] %v491
    %494 = vst [vmem:[%s2 + $0x8] sm:$0xff] %v492
    %v495 = vld [vmem:[%s434] sm:$0xff]
    %v496 = vld [vmem:[%s434 + $0x8] sm:$0xff]
    %v497 = vsub.f32 %v495, %v420
    %v498 = vsub.f32 %v496, %v420
    %v499 = vmul.f32 %v497, %v490
    %v500 = vmul.f32 %v498, %v490
    %501 = vst [vmem:[%s434] sm:$0xff] %v499
    %502 = vst [vmem:[%s434 + $0x8] sm:$0xff] %v500
  $region17: #{conv2d_glow.1} parent=0 // pred_fallthru
    _
  // Predicated region
  $region18: #{conv2d_glow.1} parent=0 // pred_check
    _
  $region19: #{conv2d_glow.1} parent=0 // pred_check_branch
    %504 = sbr.rel (0) target = $region21
  $region20: #{conv2d_glow.1} parent=0 // pred_region
    _
  $region21: #{conv2d_glow.1} parent=0 // pred_fallthru
    _
  // Predicated region
  $region22: #{conv2d_glow.1} parent=0 // pred_check
    _
  $region23: #{conv2d_glow.1} parent=0 // pred_check_branch
    %506 = sbr.rel (0) target = $region25
  $region24: #{conv2d_glow.1} parent=0 // pred_region
    _
  $region25: #{conv2d_glow.1} parent=0 // pred_fallthru
    _

</llo_original>
